<compile_context>
chip_gen: v5e
topology: v5e:2x2
jax: 0.10.0
libtpu: 0.0.40
codegen_flags: <defaults>
</compile_context>

<pallas_src>
import jax
import jax.numpy as jnp
from jax.experimental import pallas as pl
from jax.experimental.pallas import tpu as pltpu


def linear_kernel(params_ref, xt_ref, o_ref):
    # params_ref: SMEM (4,) f32 = [w0, w1, w2, b]
    # xt_ref:     VMEM (3, TB) f32   (features on sublanes, batch on lanes)
    # o_ref:      VMEM (1, TB) f32   (lane-dense output slab)
    w0 = params_ref[0]
    w1 = params_ref[1]
    w2 = params_ref[2]
    b = params_ref[3]
    x0 = xt_ref[0:1, :]          # (1, TB)
    x1 = xt_ref[1:2, :]
    x2 = xt_ref[2:3, :]
    # Three VPU FMAs over full lane-dense vregs + scalar bias broadcast.
    o_ref[...] = (x0 * w0 + x1 * w1 + x2 * w2 + b).astype(o_ref.dtype)


def multivariate_linear_regression(x, weight, bias):
    """x: (B, 3) f32, weight: (1, 3) f32, bias: (1,) f32 -> (B, 1) f32."""
    B, F = x.shape
    O = weight.shape[0]
    assert F == 3 and O == 1

    # Lane-dense batch tile: multiple of 128, capped at 2048 lanes
    # (3 * 2048 * 4 B = 24 KiB per input tile; trivially fits VMEM even
    # double-buffered, while keeping per-grid-step overhead small).
    TB = min(2048, max(128, ((B + 127) // 128) * 128))
    b_pad = ((B + TB - 1) // TB) * TB
    n_tiles = b_pad // TB

    # (F, B) layout: batch on the lane axis.  Zero-pad the tail tile so every
    # grid step sees a full, well-defined block (layout plumbing done once in
    # the XLA wrapper, not per kernel step).
    xt = jnp.transpose(x)                                    # (3, B)
    if b_pad != B:
        xt = jnp.pad(xt, ((0, 0), (0, b_pad - B)))           # (3, b_pad)

    # 4 floats of parameters -> flat SMEM array [w0, w1, w2, b].
    params = jnp.concatenate(
        [weight.reshape(-1), bias.reshape(-1)]).astype(jnp.float32)  # (4,)

    out_t = pl.pallas_call(
        linear_kernel,
        out_shape=jax.ShapeDtypeStruct((O, b_pad), x.dtype),
        grid_spec=pltpu.PrefetchScalarGridSpec(
            num_scalar_prefetch=0,
            grid=(n_tiles,),
            in_specs=[
                pl.BlockSpec(memory_space=pltpu.MemorySpace.SMEM),   # params
                pl.BlockSpec((F, TB), lambda i: (0, i)),             # x^T tile
            ],
            out_specs=pl.BlockSpec((O, TB), lambda i: (0, i)),
        ),
        compiler_params=pltpu.CompilerParams(
            dimension_semantics=("parallel",)),
    )(params, xt)

    # Back to PyTorch layout: (B, 1).
    return jnp.transpose(out_t[:, :B])


if __name__ == "__main__":
    key = jax.random.PRNGKey(0)
    kx, kw, kb = jax.random.split(key, 3)

    B, IN_F, OUT_F = 8, 3, 1
    x = jax.random.normal(kx, (B, IN_F), dtype=jnp.float32)
    # Deterministic parameter init mimicking nn.Linear's uniform(-1/sqrt(3), 1/sqrt(3))
    bound = 1.0 / jnp.sqrt(jnp.float32(IN_F))
    weight = jax.random.uniform(kw, (OUT_F, IN_F), dtype=jnp.float32,
                                minval=-bound, maxval=bound)
    bias = jax.random.uniform(kb, (OUT_F,), dtype=jnp.float32,
                              minval=-bound, maxval=bound)

    y = multivariate_linear_regression(x, weight, bias)
    y = jax.block_until_ready(y)

    # Verify against plain-JAX reference (same semantics as torch nn.Linear).
    y_ref = x @ weight.T + bias
    assert y.shape == (B, OUT_F)
    assert jnp.allclose(y, y_ref, atol=1e-5, rtol=1e-5)
    print("KERNEL_OK")
</pallas_src>

<mosaic_0001>
module attributes {stable_mosaic.version = 11 : i64} {
  func.func @linear_kernel(%arg0: i32, %arg1: memref<4xf32, #tpu.memory_space<smem>>, %arg2: memref<3x128xf32, #tpu.memory_space<vmem>>, %arg3: memref<1x128xf32, #tpu.memory_space<vmem>>) attributes {dimension_semantics = [#tpu.dimension_semantics<parallel>], iteration_bounds = array<i64: 1>, scalar_prefetch = 0 : i64, scratch_operands = 0 : i64, tpu.core_type = #tpu.core_type<tc>, window_params = [{transform_indices = @transform_0, window_bounds = array<i64: 4>}, {transform_indices = @transform_1, window_bounds = array<i64: 3, 128>}, {transform_indices = @transform_2, window_bounds = array<i64: 1, 128>}]} {
    %c0 = arith.constant 0 : index
    %0 = memref.load %arg1[%c0] : memref<4xf32, #tpu.memory_space<smem>>
    %c1 = arith.constant 1 : index
    %1 = memref.load %arg1[%c1] : memref<4xf32, #tpu.memory_space<smem>>
    %c2 = arith.constant 2 : index
    %2 = memref.load %arg1[%c2] : memref<4xf32, #tpu.memory_space<smem>>
    %c3 = arith.constant 3 : index
    %3 = memref.load %arg1[%c3] : memref<4xf32, #tpu.memory_space<smem>>
    %c0_0 = arith.constant 0 : index
    %c0_1 = arith.constant 0 : index
    %4 = vector.load %arg2[%c0_0, %c0_1] : memref<3x128xf32, #tpu.memory_space<vmem>>, vector<1x128xf32>
    %c1_2 = arith.constant 1 : index
    %c0_3 = arith.constant 0 : index
    %5 = vector.load %arg2[%c1_2, %c0_3] : memref<3x128xf32, #tpu.memory_space<vmem>>, vector<1x128xf32>
    %c2_4 = arith.constant 2 : index
    %c0_5 = arith.constant 0 : index
    %6 = vector.load %arg2[%c2_4, %c0_5] : memref<3x128xf32, #tpu.memory_space<vmem>>, vector<1x128xf32>
    %7 = vector.broadcast %0 : f32 to vector<1x128xf32>
    %8 = arith.mulf %4, %7 : vector<1x128xf32>
    %9 = vector.broadcast %1 : f32 to vector<1x128xf32>
    %10 = arith.mulf %5, %9 : vector<1x128xf32>
    %11 = arith.addf %8, %10 : vector<1x128xf32>
    %12 = vector.broadcast %2 : f32 to vector<1x128xf32>
    %13 = arith.mulf %6, %12 : vector<1x128xf32>
    %14 = arith.addf %11, %13 : vector<1x128xf32>
    %15 = vector.broadcast %3 : f32 to vector<1x128xf32>
    %16 = arith.addf %14, %15 : vector<1x128xf32>
    %c0_6 = arith.constant 0 : index
    %c0_7 = arith.constant 0 : index
    %17 = vector.load %arg3[%c0_6, %c0_7] : memref<1x128xf32, #tpu.memory_space<vmem>>, vector<1x128xf32>
    tpu.vector_store %arg3[%c0_6, %c0_7], %16 {strides = array<i32>} : memref<1x128xf32, #tpu.memory_space<vmem>>, vector<1x128xf32>,
    return
  }
  func.func @transform_0(%arg0: i32) -> i32 {
    %c0_i32 = arith.constant 0 : i32
    %c0_i32_0 = arith.constant 0 : i32
    return %c0_i32 : i32
  }
  func.func @transform_1(%arg0: i32) -> (i32, i32) {
    %c0_i32 = arith.constant 0 : i32
    %c0_i32_0 = arith.constant 0 : i32
    return %c0_i32, %arg0 : i32, i32
  }
  func.func @transform_2(%arg0: i32) -> (i32, i32) {
    %c0_i32 = arith.constant 0 : i32
    %c0_i32_0 = arith.constant 0 : i32
    return %c0_i32, %arg0 : i32, i32
  }
}

</mosaic_0001>

<llo_original>
// kernel: tpu_custom_call.1
$region0: #{tpu_custom_call.1}
  #allocation0 [shape = 'u32[]', space=smem, size = 0x4, offset = 0x4, fixed_abs, tag = 'smem constant byte address 0x4 - core index']
  #allocation1 [shape = 'u32[72,128]{1,0:T(1,128)}', space=vmem, size = 0x9000, scoped, tag = 'internal scratch']
  %s0 = inlined_call_operand.hbm [shape: f32[4], index: 0, kind: input, shape index: {}]
  %s1 = inlined_call_operand.hbm [shape: f32[3,128], index: 1, kind: input, shape index: {}]
  %s2 = inlined_call_operand.hbm [shape: f32[1,128], index: 2, kind: output, shape index: {}]
  %s3 = sld [smem:[#allocation0]]
  $region26: #{tpu_custom_call.1} parent=0
    _
  %s5 = ssub.s32 1, %s3
  %s6 = scalar_select 0, %s5, %s3
  $region1: #{tpu_custom_call.1} parent=0
    #allocation2 [shape = 'u8[512]{0}', space=smem, size = 0x200, scoped, tag = 'input window, operand 0, single buffered']
    #allocation3 [shape = 's32[1]{0}', space=sflag, size = 0x4, scoped, tag = 'scoped memory for tpu_custom_call.1']
    #allocation4 [shape = 's32[1]{0}', space=sflag, size = 0x4, scoped, tag = 'scoped memory for tpu_custom_call.1']
    #allocation5 [shape = 's32[1]{0}', space=sflag, size = 0x4, scoped, tag = 'scoped memory for tpu_custom_call.1']
    #allocation6 [shape = 'u8[2048]{0}', space=vmem, size = 0x800, scoped, tag = 'input window, operand 1, single buffered']
    #allocation7 [shape = 'u8[512]{0}', space=vmem, size = 0x400, scoped, tag = 'output window, operand 0, single buffered']
    %7 = vsyncpa [#allocation5], 0
    %8 = vsyncpa [#allocation3], 0
    %9 = vsyncpa [#allocation4], 0
    // Predicated region
    $region2: #{tpu_custom_call.1} parent=1 // pred_check
      _
    $region3: #{tpu_custom_call.1} parent=1 // pred_check_branch
      %11 = sbr.rel (0) target = $region5
    $region4: #{tpu_custom_call.1} parent=1 // pred_region
      %13 = vsyncadd [#allocation5], 0
      %s15 = sshll.u32 %s0, 4
      %s16 = int_to_ptr.hbm [resolvable:$true] %s15
      %18 = dma.hbm_to_smem %s16, 16, [#allocation2], [#allocation5]
    $region5: #{tpu_custom_call.1} parent=1 // pred_fallthru
      _
    // Predicated region
    $region6: #{tpu_custom_call.1} parent=1 // pred_check
      _
    $region7: #{tpu_custom_call.1} parent=1 // pred_check_branch
      %20 = sbr.rel (0) target = $region9
    $region8: #{tpu_custom_call.1} parent=1 // pred_region
      %22 = vsyncadd [#allocation3], 0
      %s24 = sshll.u32 %s1, 4
      %s25 = int_to_ptr.hbm [resolvable:$true] %s24
      %s26 = sshll.u32 [#allocation6], 4
      %s27 = int_to_ptr.vmem [resolvable:$true] %s26
      %29 = dma.hbm_to_vmem [thread:$0]  %s25, 64, %s27, [#allocation3]
    $region9: #{tpu_custom_call.1} parent=1 // pred_fallthru
      _
    // Predicated region
    $region10: #{tpu_custom_call.1} parent=1 // pred_check
      _
    $region11: #{tpu_custom_call.1} parent=1 // pred_check_branch
      %31 = sbr.rel (0) target = $region13
    $region12: #{tpu_custom_call.1} parent=1 // pred_region
      %33 = dma.done [#allocation5], 16
    $region13: #{tpu_custom_call.1} parent=1 // pred_fallthru
      _
    // Predicated region
    $region14: #{tpu_custom_call.1} parent=1 // pred_check
      _
    $region15: #{tpu_custom_call.1} parent=1 // pred_check_branch
      %35 = sbr.rel (0) target = $region17
    $region16: #{tpu_custom_call.1} parent=1 // pred_region
      %37 = dma.done [#allocation3], 64
    $region17: #{tpu_custom_call.1} parent=1 // pred_fallthru
      _
    %38 = sfence
    %s39 = sld [smem:[#allocation2]]
    %s40 = sld [smem:[#allocation2 + $0x1]]
    %s41 = sld [smem:[#allocation2 + $0x2]]
    %s42 = sld [smem:[#allocation2 + $0x3]]
    %v43 = vld [vmem:[#allocation6] sm:$0x1]
    %v44 = vld [vmem:[#allocation6 + $0x1] sm:$0x1]
    %v45 = vld [vmem:[#allocation6 + $0x2] sm:$0x1]
    %v46 = vstv %s39
    %v47 = vmul.f32 %v43, %v46
    %v48 = vstv %s40
    %v49 = vmul.f32 %v44, %v48
    %v50 = vadd.f32 %v47, %v49
    %v51 = vstv %s41
    %v52 = vmul.f32 %v45, %v51
    %v53 = vadd.f32 %v50, %v52
    %v54 = vstv %s42
    %v55 = vadd.f32 %v53, %v54
    %56 = vst [vmem:[#allocation7] sm:$0x1] %v55
    // Predicated region
    $region18: #{tpu_custom_call.1} parent=1 // pred_check
      _
    $region19: #{tpu_custom_call.1} parent=1 // pred_check_branch
      %58 = sbr.rel (0) target = $region21
    $region20: #{tpu_custom_call.1} parent=1 // pred_region
      %60 = vsyncadd [#allocation4], 0
      %s62 = sshll.u32 [#allocation7], 4
      %s63 = int_to_ptr.vmem [resolvable:$true] %s62
      %s64 = sshll.u32 %s2, 4
      %s65 = int_to_ptr.hbm [resolvable:$true] %s64
      %67 = dma.vmem_to_hbm [thread:$0]  %s63, 16, %s65, [#allocation4]
    $region21: #{tpu_custom_call.1} parent=1 // pred_fallthru
      _
    // Predicated region
    $region22: #{tpu_custom_call.1} parent=1 // pred_check
      _
    $region23: #{tpu_custom_call.1} parent=1 // pred_check_branch
      %69 = sbr.rel (0) target = $region25
    $region24: #{tpu_custom_call.1} parent=1 // pred_region
      %71 = dma.done [#allocation4], 16
    $region25: #{tpu_custom_call.1} parent=1 // pred_fallthru
      _
    %72 = vsyncpa [#allocation3], 1
    %73 = vsyncpa [#allocation4], 1
    %74 = vsyncpa [#allocation5], 1

</llo_original>
